<compile_context>
chip_gen: v5e
topology: v5e:2x2
jax: 0.10.0
libtpu: 0.0.40
codegen_flags: <defaults>
</compile_context>

<pallas_src>
import functools

import jax
import jax.numpy as jnp
from jax.experimental import pallas as pl
from jax.experimental.pallas import tpu as pltpu

_LANE = 128
_NEG_BIG = -1e30


# ----------------------------- Pallas kernel ------------------------------- #

def _fused_gcn_kernel(adj_ref, h0_ref, bias_ref, o_ref, *, n_layers, valid_d):
    """All L GCN layers (+ReLU each) and the final log_softmax in one program."""
    h = h0_ref[...]                                  # [V, DP] activation carry (vregs)

    for l in range(n_layers):                        # static unroll, L known at trace time
        # res[v, :] = sum_{edges e=(u->v)} w_e * H[u, :]  ->  dense A @ H (eSUM)
        acc = jnp.dot(adj_ref[l], h, preferred_element_type=jnp.float32)
        h = jnp.maximum(acc + bias_ref[l], 0.0)      # bias_ref[l]: [1, DP] broadcasts

    # log_softmax over the valid feature lanes only (pad lanes must not contribute).
    col = jax.lax.broadcasted_iota(jnp.int32, h.shape, 1)
    masked = jnp.where(col < valid_d, h, _NEG_BIG)
    m = jnp.max(masked, axis=1, keepdims=True)
    shifted = masked - m
    lse = jnp.log(jnp.sum(jnp.exp(shifted), axis=1, keepdims=True))
    o_ref[...] = shifted - lse                       # lane-dense (V, 128) store


# ------------------------------- Model glue -------------------------------- #

@jax.jit
def compressed_model_forward(features, adjs, biases):
    """Pallas equivalent of Compressed_Model.forward.

    features: [V, D] f32   adjs: [L, V, V] dense per-layer weighted adjacency
    biases:   [L, D] f32
    """
    V, D = features.shape
    L = adjs.shape[0]
    DP = max(_LANE, ((D + _LANE - 1) // _LANE) * _LANE)   # lane-dense feature width

    h0 = jnp.zeros((V, DP), jnp.float32).at[:, :D].set(features.astype(jnp.float32))
    b = jnp.zeros((L, 1, DP), jnp.float32).at[:, 0, :D].set(biases.astype(jnp.float32))
    adjs = adjs.astype(jnp.float32)

    out_padded = pl.pallas_call(
        functools.partial(_fused_gcn_kernel, n_layers=L, valid_d=D),
        out_shape=jax.ShapeDtypeStruct((V, DP), jnp.float32),
        in_specs=[
            pl.BlockSpec(memory_space=pltpu.MemorySpace.VMEM),   # adjs  [L, V, V]
            pl.BlockSpec(memory_space=pltpu.MemorySpace.VMEM),   # h0    [V, DP]
            pl.BlockSpec(memory_space=pltpu.MemorySpace.VMEM),   # bias  [L, 1, DP]
        ],
        out_specs=pl.BlockSpec(memory_space=pltpu.MemorySpace.VMEM),
    )(adjs, h0, b)

    return out_padded[:, :D]


def densify_graph(src, dst, edge_weight, num_vcount):
    """Scatter the (E,1) per-edge parameter into a dense [V, V] adjacency (eSUM)."""
    w = edge_weight.reshape(-1).astype(jnp.float32)
    adj = jnp.zeros((num_vcount, num_vcount), jnp.float32)
    return adj.at[dst, src].add(w)   # duplicate edges accumulate, matching eSUM


def reference_forward(features, adjs, biases):
    h = features
    for i in range(adjs.shape[0]):
        h = jnp.maximum(adjs[i] @ h + biases[i][None, :], 0.0)
    m = jnp.max(h, axis=1, keepdims=True)
    return (h - m) - jnp.log(jnp.sum(jnp.exp(h - m), axis=1, keepdims=True))


# ---------------------------------- Main ------------------------------------ #

if __name__ == "__main__":
    key = jax.random.PRNGKey(0)

    # Small synthetic shapes implied by the module:
    #   num_vcount = 64, feature dim = 32 (scalar edge weights keep dim constant),
    #   n_layers = 3, num_ecount = 256 per layer.
    V = 64
    D = 32
    E = 256
    N_LAYERS = 3

    key, kf = jax.random.split(key)
    features = jax.random.normal(kf, (V, D), jnp.float32)

    adj_list, bias_list = [], []
    for _ in range(N_LAYERS):
        key, ks, kd, kw, kb = jax.random.split(key, 5)
        src = jax.random.randint(ks, (E,), 0, V)
        dst = jax.random.randint(kd, (E,), 0, V)
        edge_w = jax.random.normal(kw, (E, 1), jnp.float32) * 0.1   # nn.Parameter weight [E,1]
        bias = jax.random.normal(kb, (D,), jnp.float32) * 0.1       # nn.Parameter bias  [D]
        adj_list.append(densify_graph(src, dst, edge_w, V))
        bias_list.append(bias)

    adjs = jnp.stack(adj_list)      # [L, V, V]
    biases = jnp.stack(bias_list)   # [L, D]

    out = compressed_model_forward(features, adjs, biases)
    out = jax.block_until_ready(out)

    ref = reference_forward(features, adjs, biases)
    assert out.shape == (V, D)
    assert jnp.allclose(out, ref, atol=1e-4, rtol=1e-4), "mismatch vs. JAX reference"

    print("KERNEL_OK")
</pallas_src>

<mosaic_0001>
module attributes {stable_mosaic.version = 11 : i64} {
  func.func @_fused_gcn_kernel(%arg0: memref<3x64x64xf32, #tpu.memory_space<vmem>>, %arg1: memref<64x128xf32, #tpu.memory_space<vmem>>, %arg2: memref<3x1x128xf32, #tpu.memory_space<vmem>>, %arg3: memref<64x128xf32, #tpu.memory_space<vmem>>) attributes {dimension_semantics = [], scalar_prefetch = 0 : i64, scratch_operands = 0 : i64, tpu.core_type = #tpu.core_type<tc>} {
    %c0 = arith.constant 0 : index
    %c0_0 = arith.constant 0 : index
    %0 = vector.load %arg1[%c0, %c0_0] : memref<64x128xf32, #tpu.memory_space<vmem>>, vector<64x128xf32>
    %c0_1 = arith.constant 0 : index
    %c0_2 = arith.constant 0 : index
    %c0_3 = arith.constant 0 : index
    %1 = vector.load %arg0[%c0_1, %c0_2, %c0_3] : memref<3x64x64xf32, #tpu.memory_space<vmem>>, vector<1x64x64xf32>
    %2 = vector.shape_cast %1 : vector<1x64x64xf32> to vector<64x64xf32>
    %cst = arith.constant dense<0.000000e+00> : vector<64x128xf32>
    %3 = tpu.matmul %2, %0, %cst {dimension_numbers = #tpu.dot_dimension_numbers<[1], [0], [0], [1], [0, 0, 1, 1], [], []>} : vector<64x64xf32>, vector<64x128xf32>, vector<64x128xf32> -> vector<64x128xf32>
    %c0_4 = arith.constant 0 : index
    %c0_5 = arith.constant 0 : index
    %c0_6 = arith.constant 0 : index
    %4 = vector.load %arg2[%c0_4, %c0_5, %c0_6] : memref<3x1x128xf32, #tpu.memory_space<vmem>>, vector<1x1x128xf32>
    %5 = vector.shape_cast %4 : vector<1x1x128xf32> to vector<1x128xf32>
    %6 = vector.broadcast %5 : vector<1x128xf32> to vector<64x128xf32>
    %7 = arith.addf %3, %6 : vector<64x128xf32>
    %cst_7 = arith.constant 0.000000e+00 : f32
    %8 = vector.broadcast %cst_7 : f32 to vector<64x128xf32>
    %9 = arith.maximumf %7, %8 : vector<64x128xf32>
    %c1 = arith.constant 1 : index
    %c0_8 = arith.constant 0 : index
    %c0_9 = arith.constant 0 : index
    %10 = vector.load %arg0[%c1, %c0_8, %c0_9] : memref<3x64x64xf32, #tpu.memory_space<vmem>>, vector<1x64x64xf32>
    %11 = vector.shape_cast %10 : vector<1x64x64xf32> to vector<64x64xf32>
    %cst_10 = arith.constant dense<0.000000e+00> : vector<64x128xf32>
    %12 = tpu.matmul %11, %9, %cst_10 {dimension_numbers = #tpu.dot_dimension_numbers<[1], [0], [0], [1], [0, 0, 1, 1], [], []>} : vector<64x64xf32>, vector<64x128xf32>, vector<64x128xf32> -> vector<64x128xf32>
    %c1_11 = arith.constant 1 : index
    %c0_12 = arith.constant 0 : index
    %c0_13 = arith.constant 0 : index
    %13 = vector.load %arg2[%c1_11, %c0_12, %c0_13] : memref<3x1x128xf32, #tpu.memory_space<vmem>>, vector<1x1x128xf32>
    %14 = vector.shape_cast %13 : vector<1x1x128xf32> to vector<1x128xf32>
    %15 = vector.broadcast %14 : vector<1x128xf32> to vector<64x128xf32>
    %16 = arith.addf %12, %15 : vector<64x128xf32>
    %cst_14 = arith.constant 0.000000e+00 : f32
    %17 = vector.broadcast %cst_14 : f32 to vector<64x128xf32>
    %18 = arith.maximumf %16, %17 : vector<64x128xf32>
    %c2 = arith.constant 2 : index
    %c0_15 = arith.constant 0 : index
    %c0_16 = arith.constant 0 : index
    %19 = vector.load %arg0[%c2, %c0_15, %c0_16] : memref<3x64x64xf32, #tpu.memory_space<vmem>>, vector<1x64x64xf32>
    %20 = vector.shape_cast %19 : vector<1x64x64xf32> to vector<64x64xf32>
    %cst_17 = arith.constant dense<0.000000e+00> : vector<64x128xf32>
    %21 = tpu.matmul %20, %18, %cst_17 {dimension_numbers = #tpu.dot_dimension_numbers<[1], [0], [0], [1], [0, 0, 1, 1], [], []>} : vector<64x64xf32>, vector<64x128xf32>, vector<64x128xf32> -> vector<64x128xf32>
    %c2_18 = arith.constant 2 : index
    %c0_19 = arith.constant 0 : index
    %c0_20 = arith.constant 0 : index
    %22 = vector.load %arg2[%c2_18, %c0_19, %c0_20] : memref<3x1x128xf32, #tpu.memory_space<vmem>>, vector<1x1x128xf32>
    %23 = vector.shape_cast %22 : vector<1x1x128xf32> to vector<1x128xf32>
    %24 = vector.broadcast %23 : vector<1x128xf32> to vector<64x128xf32>
    %25 = arith.addf %21, %24 : vector<64x128xf32>
    %cst_21 = arith.constant 0.000000e+00 : f32
    %26 = vector.broadcast %cst_21 : f32 to vector<64x128xf32>
    %27 = arith.maximumf %25, %26 : vector<64x128xf32>
    %28 = tpu.iota {dimensions = array<i32: 1>} : vector<64x128xi32>
    %c32_i32 = arith.constant 32 : i32
    %29 = vector.broadcast %c32_i32 : i32 to vector<64x128xi32>
    %30 = arith.cmpi slt, %28, %29 : vector<64x128xi32>
    %cst_22 = arith.constant -1.000000e+30 : f32
    %31 = vector.broadcast %cst_22 : f32 to vector<64x128xf32>
    %32 = arith.select %30, %27, %31 : vector<64x128xi1>, vector<64x128xf32>
    %cst_23 = arith.constant dense<0xFF800000> : vector<64xf32>
    %33 = vector.multi_reduction <maximumf>, %32, %cst_23 [1] : vector<64x128xf32> to vector<64xf32>
    %34 = vector.shape_cast %33 : vector<64xf32> to vector<64x1xf32>
    %35 = vector.broadcast %34 : vector<64x1xf32> to vector<64x128xf32>
    %36 = arith.subf %32, %35 : vector<64x128xf32>
    %37 = math.exp %36 : vector<64x128xf32>
    %cst_24 = arith.constant dense<0.000000e+00> : vector<64xf32>
    %38 = vector.multi_reduction <add>, %37, %cst_24 [1] : vector<64x128xf32> to vector<64xf32>
    %39 = vector.shape_cast %38 : vector<64xf32> to vector<64x1xf32>
    %40 = math.log %39 : vector<64x1xf32>
    %41 = vector.broadcast %40 : vector<64x1xf32> to vector<64x128xf32>
    %42 = arith.subf %36, %41 : vector<64x128xf32>
    %c0_25 = arith.constant 0 : index
    %c0_26 = arith.constant 0 : index
    %43 = vector.load %arg3[%c0_25, %c0_26] : memref<64x128xf32, #tpu.memory_space<vmem>>, vector<64x128xf32>
    tpu.vector_store %arg3[%c0_25, %c0_26], %42 {strides = array<i32>} : memref<64x128xf32, #tpu.memory_space<vmem>>, vector<64x128xf32>,
    return
  }
}

</mosaic_0001>

<llo_original>
// kernel: compressed_model_forward.1
$region0: #{compressed_model_forward.1}
  #allocation0 [shape = 'u32[]', space=smem, size = 0x4, offset = 0x4, fixed_abs, tag = 'smem constant byte address 0x4 - core index']
  #allocation1 [shape = 'u32[72,128]{1,0:T(1,128)}', space=vmem, size = 0x9000, scoped, tag = 'internal scratch']
  %s0 = inlined_call_operand.vmem [shape: f32[3,64,64], index: 0, kind: input, shape index: {}]
  %s1 = inlined_call_operand.vmem [shape: f32[64,128], index: 1, kind: input, shape index: {}]
  %s2 = inlined_call_operand.vmem [shape: f32[3,1,128], index: 2, kind: input, shape index: {}]
  %s3 = inlined_call_operand.vmem [shape: f32[64,128], index: 3, kind: output, shape index: {}]
  %s4 = sld [smem:[#allocation0]]
  $region22: #{compressed_model_forward.1} parent=0
    _
  %s6 = ssub.s32 1, %s4
  %s7 = scalar_select 0, %s6, %s4
  // Predicated region
  $region2: #{compressed_model_forward.1} parent=0 // pred_check
    _
  $region3: #{compressed_model_forward.1} parent=0 // pred_check_branch
    %9 = sbr.rel (0) target = $region5
  $region4: #{compressed_model_forward.1} parent=0 // pred_region
    _
  $region5: #{compressed_model_forward.1} parent=0 // pred_fallthru
    _
  // Predicated region
  $region6: #{compressed_model_forward.1} parent=0 // pred_check
    _
  $region7: #{compressed_model_forward.1} parent=0 // pred_check_branch
    %11 = sbr.rel (0) target = $region9
  $region8: #{compressed_model_forward.1} parent=0 // pred_region
    _
  $region9: #{compressed_model_forward.1} parent=0 // pred_fallthru
    _
  // Predicated region
  $region10: #{compressed_model_forward.1} parent=0 // pred_check
    _
  $region11: #{compressed_model_forward.1} parent=0 // pred_check_branch
    %13 = sbr.rel (0) target = $region13
  $region12: #{compressed_model_forward.1} parent=0 // pred_region
    _
  $region13: #{compressed_model_forward.1} parent=0 // pred_fallthru
    _
  %v14 = vld [vmem:[%s1] sm:$0xff]
  %v15 = vld [vmem:[%s1 + $0x8] sm:$0xff]
  %v16 = vld [vmem:[%s1 + $0x10] sm:$0xff]
  %v17 = vld [vmem:[%s1 + $0x18] sm:$0xff]
  %v18 = vld [vmem:[%s1 + $0x20] sm:$0xff]
  %v19 = vld [vmem:[%s1 + $0x28] sm:$0xff]
  %v20 = vld [vmem:[%s1 + $0x30] sm:$0xff]
  %v21 = vld [vmem:[%s1 + $0x38] sm:$0xff]
  %v22 = vld [vmem:[%s0] sm:$0xff]
  %v23 = vld [vmem:[%s0 + $0x8] sm:$0xff]
  %v24 = vld [vmem:[%s0 + $0x10] sm:$0xff]
  %v25 = vld [vmem:[%s0 + $0x18] sm:$0xff]
  %v26 = vld [vmem:[%s0 + $0x20] sm:$0xff]
  %v27 = vld [vmem:[%s0 + $0x28] sm:$0xff]
  %v28 = vld [vmem:[%s0 + $0x30] sm:$0xff]
  %v29 = vld [vmem:[%s0 + $0x38] sm:$0xff]
  %v30 = vld [vmem:[%s2] sm:$0x1]
  %v32 = vperm.slane %v30, 0
  %vm34 = vcmask 523264
  %v36 = vsel %vm34, %v22, 0
  %v39 = vsel %vm34, %v23, 0
  %v42 = vsel %vm34, %v24, 0
  %v45 = vsel %vm34, %v25, 0
  %v48 = vsel %vm34, %v26, 0
  %v51 = vsel %vm34, %v27, 0
  %v54 = vsel %vm34, %v28, 0
  %v57 = vsel %vm34, %v29, 0
  %59 = vmatpush.msra.mxu0 0.0
  %60 = vmatpush.msra.mxu0 0.0
  %61 = vmatpush.msra.mxu0 0.0
  %62 = vmatpush.msra.mxu0 0.0
  %63 = vmatpush.msra.mxu0 0.0
  %64 = vmatpush.msra.mxu0 0.0
  %65 = vmatpush.msra.mxu0 0.0
  %66 = vmatpush.msra.mxu0 0.0
  %67 = vmatpush.msra.mxu0 %v21
  %68 = vmatpush.msra.mxu0 %v20
  %69 = vmatpush.msra.mxu0 %v19
  %70 = vmatpush.msra.mxu0 %v18
  %71 = vmatpush.msra.mxu0 %v17
  %72 = vmatpush.msra.mxu0 %v16
  %73 = vmatpush.msra.mxu0 %v15
  %74 = vmatpush.msra.mxu0 %v14
  %75 = vmatmul.f32.gmra.mxu0 %v36
  %v76 = vpop.f32.mrf.mxu0
  %v77 = vadd.f32 %v32, %v76
  %78 = vmatmul.f32.gmra.mxu0 %v39
  %v79 = vpop.f32.mrf.mxu0
  %v80 = vadd.f32 %v32, %v79
  %81 = vmatmul.f32.gmra.mxu0 %v42
  %v82 = vpop.f32.mrf.mxu0
  %v83 = vadd.f32 %v32, %v82
  %84 = vmatmul.f32.gmra.mxu0 %v45
  %v85 = vpop.f32.mrf.mxu0
  %v86 = vadd.f32 %v32, %v85
  %87 = vmatmul.f32.gmra.mxu0 %v48
  %v88 = vpop.f32.mrf.mxu0
  %v89 = vadd.f32 %v32, %v88
  %90 = vmatmul.f32.gmra.mxu0 %v51
  %v91 = vpop.f32.mrf.mxu0
  %v92 = vadd.f32 %v32, %v91
  %93 = vmatmul.f32.gmra.mxu0 %v54
  %v94 = vpop.f32.mrf.mxu0
  %v95 = vadd.f32 %v32, %v94
  %96 = vmatmul.f32.gmra.mxu0 %v57
  %v97 = vpop.f32.mrf.mxu0
  %v98 = vadd.f32 %v32, %v97
  %99 = vdwg.mxu0
  %v100 = vmax.f32 %v77, 0.0
  %v101 = vmax.f32 %v80, 0.0
  %v102 = vmax.f32 %v83, 0.0
  %v103 = vmax.f32 %v86, 0.0
  %v104 = vmax.f32 %v89, 0.0
  %v105 = vmax.f32 %v92, 0.0
  %v106 = vmax.f32 %v95, 0.0
  %v107 = vmax.f32 %v98, 0.0
  %s108 = scalar_lea.vmem %s0, 64
  %v109 = vld [vmem:[%s108] sm:$0xff]
  %v110 = vld [vmem:[%s108 + $0x8] sm:$0xff]
  %v111 = vld [vmem:[%s108 + $0x10] sm:$0xff]
  %v112 = vld [vmem:[%s108 + $0x18] sm:$0xff]
  %v113 = vld [vmem:[%s108 + $0x20] sm:$0xff]
  %v114 = vld [vmem:[%s108 + $0x28] sm:$0xff]
  %v115 = vld [vmem:[%s108 + $0x30] sm:$0xff]
  %v116 = vld [vmem:[%s108 + $0x38] sm:$0xff]
  %s117 = scalar_lea.vmem %s2, 1
  %v118 = vld [vmem:[%s117] sm:$0x1]
  %v120 = vperm.slane %v118, 0
  %v123 = vsel %vm34, %v109, 0
  %v126 = vsel %vm34, %v110, 0
  %v129 = vsel %vm34, %v111, 0
  %v132 = vsel %vm34, %v112, 0
  %v135 = vsel %vm34, %v113, 0
  %v138 = vsel %vm34, %v114, 0
  %v141 = vsel %vm34, %v115, 0
  %v144 = vsel %vm34, %v116, 0
  %146 = vmatpush.msra.mxu0 0.0
  %147 = vmatpush.msra.mxu0 0.0
  %148 = vmatpush.msra.mxu0 0.0
  %149 = vmatpush.msra.mxu0 0.0
  %150 = vmatpush.msra.mxu0 0.0
  %151 = vmatpush.msra.mxu0 0.0
  %152 = vmatpush.msra.mxu0 0.0
  %153 = vmatpush.msra.mxu0 0.0
  %154 = vmatpush.msra.mxu0 %v107
  %155 = vmatpush.msra.mxu0 %v106
  %156 = vmatpush.msra.mxu0 %v105
  %157 = vmatpush.msra.mxu0 %v104
  %158 = vmatpush.msra.mxu0 %v103
  %159 = vmatpush.msra.mxu0 %v102
  %160 = vmatpush.msra.mxu0 %v101
  %161 = vmatpush.msra.mxu0 %v100
  %162 = vmatmul.f32.gmra.mxu0 %v123
  %v163 = vpop.f32.mrf.mxu0
  %v164 = vadd.f32 %v120, %v163
  %165 = vmatmul.f32.gmra.mxu0 %v126
  %v166 = vpop.f32.mrf.mxu0
  %v167 = vadd.f32 %v120, %v166
  %168 = vmatmul.f32.gmra.mxu0 %v129
  %v169 = vpop.f32.mrf.mxu0
  %v170 = vadd.f32 %v120, %v169
  %171 = vmatmul.f32.gmra.mxu0 %v132
  %v172 = vpop.f32.mrf.mxu0
  %v173 = vadd.f32 %v120, %v172
  %174 = vmatmul.f32.gmra.mxu0 %v135
  %v175 = vpop.f32.mrf.mxu0
  %v176 = vadd.f32 %v120, %v175
  %177 = vmatmul.f32.gmra.mxu0 %v138
  %v178 = vpop.f32.mrf.mxu0
  %v179 = vadd.f32 %v120, %v178
  %180 = vmatmul.f32.gmra.mxu0 %v141
  %v181 = vpop.f32.mrf.mxu0
  %v182 = vadd.f32 %v120, %v181
  %183 = vmatmul.f32.gmra.mxu0 %v144
  %v184 = vpop.f32.mrf.mxu0
  %v185 = vadd.f32 %v120, %v184
  %186 = vdwg.mxu0
  %v187 = vmax.f32 %v164, 0.0
  %v188 = vmax.f32 %v167, 0.0
  %v189 = vmax.f32 %v170, 0.0
  %v190 = vmax.f32 %v173, 0.0
  %v191 = vmax.f32 %v176, 0.0
  %v192 = vmax.f32 %v179, 0.0
  %v193 = vmax.f32 %v182, 0.0
  %v194 = vmax.f32 %v185, 0.0
  %s195 = scalar_lea.vmem %s0, 128
  %v196 = vld [vmem:[%s195] sm:$0xff]
  %v197 = vld [vmem:[%s195 + $0x8] sm:$0xff]
  %v198 = vld [vmem:[%s195 + $0x10] sm:$0xff]
  %v199 = vld [vmem:[%s195 + $0x18] sm:$0xff]
  %v200 = vld [vmem:[%s195 + $0x20] sm:$0xff]
  %v201 = vld [vmem:[%s195 + $0x28] sm:$0xff]
  %v202 = vld [vmem:[%s195 + $0x30] sm:$0xff]
  %v203 = vld [vmem:[%s195 + $0x38] sm:$0xff]
  %s204 = scalar_lea.vmem %s2, 2
  %v205 = vld [vmem:[%s204] sm:$0x1]
  %v207 = vperm.slane %v205, 0
  %v210 = vsel %vm34, %v196, 0
  %v213 = vsel %vm34, %v197, 0
  %v216 = vsel %vm34, %v198, 0
  %v219 = vsel %vm34, %v199, 0
  %v222 = vsel %vm34, %v200, 0
  %v225 = vsel %vm34, %v201, 0
  %v228 = vsel %vm34, %v202, 0
  %v231 = vsel %vm34, %v203, 0
  %233 = vmatpush.msra.mxu0 0.0
  %234 = vmatpush.msra.mxu0 0.0
  %235 = vmatpush.msra.mxu0 0.0
  %236 = vmatpush.msra.mxu0 0.0
  %237 = vmatpush.msra.mxu0 0.0
  %238 = vmatpush.msra.mxu0 0.0
  %239 = vmatpush.msra.mxu0 0.0
  %240 = vmatpush.msra.mxu0 0.0
  %241 = vmatpush.msra.mxu0 %v194
  %242 = vmatpush.msra.mxu0 %v193
  %243 = vmatpush.msra.mxu0 %v192
  %244 = vmatpush.msra.mxu0 %v191
  %245 = vmatpush.msra.mxu0 %v190
  %246 = vmatpush.msra.mxu0 %v189
  %247 = vmatpush.msra.mxu0 %v188
  %248 = vmatpush.msra.mxu0 %v187
  %249 = vmatmul.f32.gmra.mxu0 %v210
  %v250 = vpop.f32.mrf.mxu0
  %v251 = vadd.f32 %v207, %v250
  %252 = vmatmul.f32.gmra.mxu0 %v213
  %v253 = vpop.f32.mrf.mxu0
  %v254 = vadd.f32 %v207, %v253
  %255 = vmatmul.f32.gmra.mxu0 %v216
  %v256 = vpop.f32.mrf.mxu0
  %v257 = vadd.f32 %v207, %v256
  %258 = vmatmul.f32.gmra.mxu0 %v219
  %v259 = vpop.f32.mrf.mxu0
  %v260 = vadd.f32 %v207, %v259
  %261 = vmatmul.f32.gmra.mxu0 %v222
  %v262 = vpop.f32.mrf.mxu0
  %v263 = vadd.f32 %v207, %v262
  %264 = vmatmul.f32.gmra.mxu0 %v225
  %v265 = vpop.f32.mrf.mxu0
  %v266 = vadd.f32 %v207, %v265
  %267 = vmatmul.f32.gmra.mxu0 %v228
  %v268 = vpop.f32.mrf.mxu0
  %v269 = vadd.f32 %v207, %v268
  %270 = vmatmul.f32.gmra.mxu0 %v231
  %v271 = vpop.f32.mrf.mxu0
  %v272 = vadd.f32 %v207, %v271
  %273 = vdwg.mxu0
  %v274 = vmax.f32 %v251, 0.0
  %v275 = vmax.f32 %v254, 0.0
  %v276 = vmax.f32 %v257, 0.0
  %v277 = vmax.f32 %v260, 0.0
  %v278 = vmax.f32 %v263, 0.0
  %v279 = vmax.f32 %v266, 0.0
  %v280 = vmax.f32 %v269, 0.0
  %v281 = vmax.f32 %v272, 0.0
  %v282 = vlaneseq
  %v283 = vand.u32 %v282, 127
  %vm284 = vcmp.lt.s32.totalorder %v283, 32
  %v285 = vsel %vm284, %v274, -1e+30
  %v286 = vsel %vm284, %v275, -1e+30
  %v287 = vsel %vm284, %v276, -1e+30
  %v288 = vsel %vm284, %v277, -1e+30
  %v289 = vsel %vm284, %v278, -1e+30
  %v290 = vsel %vm284, %v279, -1e+30
  %v291 = vsel %vm284, %v280, -1e+30
  %v292 = vsel %vm284, %v281, -1e+30
  %293 = vmax.xlane.f32.xlu0 %v285
  %v294 = vpop.xlane.xlu0 %293
  %295 = vmax.xlane.f32.xlu0 %v286
  %v296 = vpop.xlane.xlu0 %295
  %297 = vmax.xlane.f32.xlu0 %v287
  %v298 = vpop.xlane.xlu0 %297
  %299 = vmax.xlane.f32.xlu0 %v288
  %v300 = vpop.xlane.xlu0 %299
  %301 = vmax.xlane.f32.xlu0 %v289
  %v302 = vpop.xlane.xlu0 %301
  %303 = vmax.xlane.f32.xlu0 %v290
  %v304 = vpop.xlane.xlu0 %303
  %305 = vmax.xlane.f32.xlu0 %v291
  %v306 = vpop.xlane.xlu0 %305
  %307 = vmax.xlane.f32.xlu0 %v292
  %v308 = vpop.xlane.xlu0 %307
  %v309 = vsub.f32 %v285, %v294
  %v310 = vsub.f32 %v286, %v296
  %v311 = vsub.f32 %v287, %v298
  %v312 = vsub.f32 %v288, %v300
  %v313 = vsub.f32 %v289, %v302
  %v314 = vsub.f32 %v290, %v304
  %v315 = vsub.f32 %v291, %v306
  %v316 = vsub.f32 %v292, %v308
  %v317 = vmul.f32 %v309, 1.442695
  %v318 = vpow.pop %v317
  %v319 = vmul.f32 %v310, 1.442695
  %v320 = vpow.pop %v319
  %v321 = vmul.f32 %v311, 1.442695
  %v322 = vpow.pop %v321
  %v323 = vmul.f32 %v312, 1.442695
  %v324 = vpow.pop %v323
  %v325 = vmul.f32 %v313, 1.442695
  %v326 = vpow.pop %v325
  %v327 = vmul.f32 %v314, 1.442695
  %v328 = vpow.pop %v327
  %v329 = vmul.f32 %v315, 1.442695
  %v330 = vpow.pop %v329
  %v331 = vmul.f32 %v316, 1.442695
  %v332 = vpow.pop %v331
  %333 = vadd.xlane.f32.xlu0 %v318
  %v334 = vpop.xlane.xlu0 %333
  %335 = vadd.xlane.f32.xlu0 %v320
  %v336 = vpop.xlane.xlu0 %335
  %337 = vadd.xlane.f32.xlu0 %v322
  %v338 = vpop.xlane.xlu0 %337
  %339 = vadd.xlane.f32.xlu0 %v324
  %v340 = vpop.xlane.xlu0 %339
  %341 = vadd.xlane.f32.xlu0 %v326
  %v342 = vpop.xlane.xlu0 %341
  %343 = vadd.xlane.f32.xlu0 %v328
  %v344 = vpop.xlane.xlu0 %343
  %345 = vadd.xlane.f32.xlu0 %v330
  %v346 = vpop.xlane.xlu0 %345
  %347 = vadd.xlane.f32.xlu0 %v332
  %v348 = vpop.xlane.xlu0 %347
  %v349 = vlog2.pop %v334
  %v350 = vmul.f32 %v349, 0.6931472
  %v351 = vlog2.pop %v336
  %v352 = vmul.f32 %v351, 0.6931472
  %v353 = vlog2.pop %v338
  %v354 = vmul.f32 %v353, 0.6931472
  %v355 = vlog2.pop %v340
  %v356 = vmul.f32 %v355, 0.6931472
  %v357 = vlog2.pop %v342
  %v358 = vmul.f32 %v357, 0.6931472
  %v359 = vlog2.pop %v344
  %v360 = vmul.f32 %v359, 0.6931472
  %v361 = vlog2.pop %v346
  %v362 = vmul.f32 %v361, 0.6931472
  %v363 = vlog2.pop %v348
  %v364 = vmul.f32 %v363, 0.6931472
  %v365 = vsub.f32 %v309, %v350
  %v366 = vsub.f32 %v310, %v352
  %v367 = vsub.f32 %v311, %v354
  %v368 = vsub.f32 %v312, %v356
  %v369 = vsub.f32 %v313, %v358
  %v370 = vsub.f32 %v314, %v360
  %v371 = vsub.f32 %v315, %v362
  %v372 = vsub.f32 %v316, %v364
  %373 = vst [vmem:[%s3] sm:$0xff] %v365
  %374 = vst [vmem:[%s3 + $0x8] sm:$0xff] %v366
  %375 = vst [vmem:[%s3 + $0x10] sm:$0xff] %v367
  %376 = vst [vmem:[%s3 + $0x18] sm:$0xff] %v368
  %377 = vst [vmem:[%s3 + $0x20] sm:$0xff] %v369
  %378 = vst [vmem:[%s3 + $0x28] sm:$0xff] %v370
  %379 = vst [vmem:[%s3 + $0x30] sm:$0xff] %v371
  %380 = vst [vmem:[%s3 + $0x38] sm:$0xff] %v372
  // Predicated region
  $region14: #{compressed_model_forward.1} parent=0 // pred_check
    _
  $region15: #{compressed_model_forward.1} parent=0 // pred_check_branch
    %382 = sbr.rel (0) target = $region17
  $region16: #{compressed_model_forward.1} parent=0 // pred_region
    _
  $region17: #{compressed_model_forward.1} parent=0 // pred_fallthru
    _
  // Predicated region
  $region18: #{compressed_model_forward.1} parent=0 // pred_check
    _
  $region19: #{compressed_model_forward.1} parent=0 // pred_check_branch
    %384 = sbr.rel (0) target = $region21
  $region20: #{compressed_model_forward.1} parent=0 // pred_region
    _
  $region21: #{compressed_model_forward.1} parent=0 // pred_fallthru
    _

</llo_original>
